<compile_context>
chip_gen: v7x
topology: tpu7x:2x2x1
jax: 0.10.0
libtpu: 0.0.40
codegen_flags: <defaults>
</compile_context>

<pallas_src>
import functools
import math

import jax
import jax.numpy as jnp
from jax.experimental import pallas as pl
from jax.experimental.pallas import tpu as pltpu

_LANE = 128
_SUBLANE = 8

# Below these sizes the Pallas path is pure overhead vs XLA's fused matmul.
_PALLAS_MIN_ROWS = 64
_PALLAS_MIN_UNITS = 128


def _round_up(n, m):
    return ((n + m - 1) // m) * m


def _skip_layer_kernel(x_ref, w_ref, b_ref, o_ref, *, use_bf16_mxu):
    # x_ref: (TM, Up)   w_ref: (Up, Up)   b_ref: (1, Up)   o_ref: (TM, Up)
    x = x_ref[...]
    # W already arrives in its MXU dtype (cast once in the wrapper); only the
    # small streamed x tile is cast here when running the bf16 MXU path.
    xm = x.astype(jnp.bfloat16) if use_bf16_mxu else x
    h = jnp.dot(xm, w_ref[...], preferred_element_type=jnp.float32)
    # Bias + residual add stay in f32; single cast on the store.
    o_ref[...] = (h + b_ref[...] + x).astype(o_ref.dtype)


def skip_layer_2d(x, w_hidden, b_hidden, *, tm=512, use_bf16_mxu=False):
    """y = x @ w_hidden + b_hidden + x for x of shape (M, U).

    w_hidden is stored input-major, i.e. PyTorch `weight.T`, shape (U, U).
    """
    M, U = x.shape
    assert w_hidden.shape == (U, U)
    assert b_hidden.shape == (U,)

    # Lane-dense padding of the feature axis only (zero fill keeps x @ W exact).
    Up = _round_up(U, _LANE)

    # Row tile: multiple of the 8-row sublane granule, clamped for small M.
    TM = min(_round_up(tm, _SUBLANE), _round_up(M, _SUBLANE))
    # v7x has 2 TensorCores: ensure the "parallel" M grid has >= 2 steps whenever
    # there are enough rows, so neither core sits idle (no-op on v5e/v6e).
    if pl.cdiv(M, TM) < 2 and M >= 2 * _SUBLANE:
        TM = _round_up(pl.cdiv(M, 2), _SUBLANE)
    n_row_blocks = pl.cdiv(M, TM)  # partial last block handled by Pallas (no M pad)

    x_p = x if Up == U else jnp.pad(x, ((0, 0), (0, Up - U)))
    w_p = w_hidden if Up == U else jnp.pad(w_hidden, ((0, Up - U), (0, Up - U)))
    if use_bf16_mxu:
        # Cast once in the wrapper: halves W's HBM read + VMEM footprint and
        # removes a per-grid-step full-Up^2 VPU cast inside the kernel.
        w_p = w_p.astype(jnp.bfloat16)
    b_p = b_hidden if Up == U else jnp.pad(b_hidden, (0, Up - U))
    b_p = b_p.reshape(1, Up).astype(jnp.float32)

    x_item = jnp.dtype(x_p.dtype).itemsize
    w_item = jnp.dtype(w_p.dtype).itemsize
    b_item = jnp.dtype(b_p.dtype).itemsize
    o_item = x_item

    # Per-operand-accurate scheduling hint (aliased output is still a full write).
    cost = pl.CostEstimate(
        flops=2 * M * Up * Up,
        transcendentals=0,
        bytes_accessed=M * Up * (x_item + o_item) + Up * Up * w_item + Up * b_item,
    )

    # Explicit scoped-VMEM budget: x/out tiles double-buffered, W/bias single-
    # buffered (Buffered(1)), plus headroom. Avoids the 16 MiB (v5e) / 32 MiB
    # (v6e/v7x) default limit biting as U grows.
    tile_bytes = (
        2 * TM * Up * x_item      # x tile, double-buffered
        + 2 * TM * Up * o_item    # out tile, double-buffered
        + 1 * Up * Up * w_item    # W, single-buffered
        + 1 * Up * b_item         # bias, single-buffered
    )
    vmem_bytes = min(128 << 20, max(4 << 20, int(tile_bytes * 1.25) + (1 << 20)))

    kernel = functools.partial(_skip_layer_kernel, use_bf16_mxu=use_bf16_mxu)

    y_p = pl.pallas_call(
        kernel,
        out_shape=jax.ShapeDtypeStruct((M, Up), x.dtype),
        grid=(n_row_blocks,),
        in_specs=[
            # x: streamed over row blocks (double-buffered by default).
            pl.BlockSpec((TM, Up), lambda i: (i, 0)),
            # W: resident; constant index_map -> single buffer is enough.
            pl.BlockSpec((Up, Up), lambda i: (0, 0), pipeline_mode=pl.Buffered(1)),
            # bias: resident, single buffer.
            pl.BlockSpec((1, Up), lambda i: (0, 0), pipeline_mode=pl.Buffered(1)),
        ],
        out_specs=pl.BlockSpec((TM, Up), lambda i: (i, 0)),
        # Residual-style op: reuse x's (padded) HBM buffer for the output.
        input_output_aliases={0: 0},
        cost_estimate=cost,
        compiler_params=pltpu.CompilerParams(
            dimension_semantics=("parallel",),
            vmem_limit_bytes=vmem_bytes,
        ),
    )(x_p, w_p, b_p)

    return y_p if Up == U else y_p[:, :U]


@functools.partial(jax.jit, static_argnames=("tm", "use_bf16_mxu", "force_pallas"))
def skip_layer(x, w_hidden, b_hidden, *, tm=512, use_bf16_mxu=False,
               force_pallas=False):
    """SkipLayer forward for x of shape (..., U): hidden(x) + x.

    Leading dims are folded into the row axis. Tiny shapes fall back to plain
    XLA (the Pallas kernel is pure overhead there) unless force_pallas=True.
    """
    U = x.shape[-1]
    lead = x.shape[:-1]
    M = math.prod(lead) if lead else 1

    if (M < _PALLAS_MIN_ROWS or U < _PALLAS_MIN_UNITS) and not force_pallas:
        # Small-shape fallback: XLA's fused matmul already wins here.
        return x @ w_hidden + b_hidden + x

    y2d = skip_layer_2d(x.reshape(M, U), w_hidden, b_hidden,
                        tm=tm, use_bf16_mxu=use_bf16_mxu)
    return y2d.reshape(*lead, U)


if __name__ == "__main__":
    units = 32
    batch, seq = 2, 8  # x: (2, 8, 32)

    key = jax.random.PRNGKey(0)
    kx, k_lw, k_lb, k_hw, k_hb = jax.random.split(key, 5)

    x = jax.random.normal(kx, (batch, seq, units), dtype=jnp.float32)

    # Deterministic nn.Linear-style init: U(-1/sqrt(units), 1/sqrt(units))
    bound = 1.0 / (units ** 0.5)
    # self.layer params exist in __init__ but are unused in forward.
    _layer_w = jax.random.uniform(k_lw, (units, units), minval=-bound, maxval=bound)
    _layer_b = jax.random.uniform(k_lb, (units,), minval=-bound, maxval=bound)
    # self.hidden params (used in forward). PyTorch stores weight as [out, in];
    # we pass the transpose so the kernel does a plain row-major matmul.
    hidden_w = jax.random.uniform(k_hw, (units, units), minval=-bound, maxval=bound)
    hidden_b = jax.random.uniform(k_hb, (units,), minval=-bound, maxval=bound)

    y_ref = x @ hidden_w.T + hidden_b + x

    # Pallas path (force past the small-shape fallback so the kernel runs).
    y = skip_layer(x, hidden_w.T, hidden_b, force_pallas=True)
    jax.block_until_ready(y)
    assert y.shape == x.shape
    assert jnp.allclose(y, y_ref, atol=1e-5, rtol=1e-5), "pallas f32 path mismatch"

    # bf16-weight MXU path (perf option on v6e/v7x): looser tolerance.
    y_bf16 = skip_layer(x, hidden_w.T, hidden_b, use_bf16_mxu=True,
                        force_pallas=True)
    jax.block_until_ready(y_bf16)
    assert jnp.allclose(y_bf16, y_ref, atol=5e-2, rtol=5e-2), "bf16 path mismatch"

    # Default call on this tiny demo shape takes the plain-XLA fallback.
    y_fb = skip_layer(x, hidden_w.T, hidden_b)
    jax.block_until_ready(y_fb)
    assert jnp.allclose(y_fb, y_ref, atol=1e-5, rtol=1e-5), "fallback mismatch"

    print("KERNEL_OK")
</pallas_src>

<mosaic_0001>
module attributes {stable_mosaic.version = 11 : i64} {
  func.func @_skip_layer_kernel(%arg0: i32, %arg1: memref<8x128xf32, #tpu.memory_space<vmem>>, %arg2: memref<128x128xf32, #tpu.memory_space<vmem>>, %arg3: memref<1x128xf32, #tpu.memory_space<vmem>>, %arg4: memref<8x128xf32, #tpu.memory_space<vmem>>) attributes {dimension_semantics = [#tpu.dimension_semantics<parallel>], iteration_bounds = array<i64: 2>, scalar_prefetch = 0 : i64, scratch_operands = 0 : i64, tpu.core_type = #tpu.core_type<tc>, window_params = [{transform_indices = @transform_0, window_bounds = array<i64: 8, 128>}, {pipeline_mode = #tpu.pipeline_mode<synchronous>, transform_indices = @transform_1, window_bounds = array<i64: 128, 128>}, {pipeline_mode = #tpu.pipeline_mode<synchronous>, transform_indices = @transform_2, window_bounds = array<i64: 1, 128>}, {transform_indices = @transform_3, window_bounds = array<i64: 8, 128>}]} {
    %c0 = arith.constant 0 : index
    %c0_0 = arith.constant 0 : index
    %0 = vector.load %arg1[%c0, %c0_0] : memref<8x128xf32, #tpu.memory_space<vmem>>, vector<8x128xf32>
    %c0_1 = arith.constant 0 : index
    %c0_2 = arith.constant 0 : index
    %1 = vector.load %arg2[%c0_1, %c0_2] : memref<128x128xf32, #tpu.memory_space<vmem>>, vector<128x128xf32>
    %cst = arith.constant dense<0.000000e+00> : vector<8x128xf32>
    %2 = tpu.matmul %0, %1, %cst {dimension_numbers = #tpu.dot_dimension_numbers<[1], [0], [0], [1], [0, 0, 1, 1], [], []>} : vector<8x128xf32>, vector<128x128xf32>, vector<8x128xf32> -> vector<8x128xf32>
    %c0_3 = arith.constant 0 : index
    %c0_4 = arith.constant 0 : index
    %3 = vector.load %arg3[%c0_3, %c0_4] : memref<1x128xf32, #tpu.memory_space<vmem>>, vector<1x128xf32>
    %4 = vector.broadcast %3 : vector<1x128xf32> to vector<8x128xf32>
    %5 = arith.addf %2, %4 : vector<8x128xf32>
    %6 = arith.addf %5, %0 : vector<8x128xf32>
    %c0_5 = arith.constant 0 : index
    %c0_6 = arith.constant 0 : index
    %7 = vector.load %arg4[%c0_5, %c0_6] : memref<8x128xf32, #tpu.memory_space<vmem>>, vector<8x128xf32>
    tpu.vector_store %arg4[%c0_5, %c0_6], %6 {strides = array<i32>} : memref<8x128xf32, #tpu.memory_space<vmem>>, vector<8x128xf32>,
    return
  }
  func.func @transform_0(%arg0: i32) -> (i32, i32) {
    %c0_i32 = arith.constant 0 : i32
    %c0_i32_0 = arith.constant 0 : i32
    return %arg0, %c0_i32 : i32, i32
  }
  func.func @transform_1(%arg0: i32) -> (i32, i32) {
    %c0_i32 = arith.constant 0 : i32
    %c0_i32_0 = arith.constant 0 : i32
    %c0_i32_1 = arith.constant 0 : i32
    return %c0_i32, %c0_i32_0 : i32, i32
  }
  func.func @transform_2(%arg0: i32) -> (i32, i32) {
    %c0_i32 = arith.constant 0 : i32
    %c0_i32_0 = arith.constant 0 : i32
    %c0_i32_1 = arith.constant 0 : i32
    return %c0_i32, %c0_i32_0 : i32, i32
  }
  func.func @transform_3(%arg0: i32) -> (i32, i32) {
    %c0_i32 = arith.constant 0 : i32
    %c0_i32_0 = arith.constant 0 : i32
    return %arg0, %c0_i32 : i32, i32
  }
}

</mosaic_0001>

<llo_original>
// kernel: skip_layer.1
$region0: #{skip_layer.1}
  #allocation0 [shape = 'u32[]', space=smem, size = 0x4, offset = 0x4, fixed_abs, tag = 'smem constant byte address 0x4 - core index']
  #allocation1 [shape = 'u32[144,128]{1,0:T(1,128)}', space=vmem, size = 0x12000, scoped, tag = 'internal scratch']
  %s0 = inlined_call_operand.vmem [shape: f32[16,128], index: 0, kind: input, shape index: {}, may-alias: {0,3}]
  %s1 = inlined_call_operand.vmem [shape: f32[128,128], index: 1, kind: input, shape index: {}]
  %s2 = inlined_call_operand.vmem [shape: f32[1,128], index: 2, kind: input, shape index: {}]
  %s3 = inlined_call_operand.vmem [shape: f32[16,128], index: 3, kind: output, shape index: {}, may-alias: {0,3}]
  %s4 = sld [smem:[#allocation0]]
  $region45: #{skip_layer.1} parent=0
    _
  %s6 = ssub.s32 1, %s4
  %s7 = scalar_select 0, %s6, %s4
  loop: start=0, step=1, limit=4
  $region2: #{skip_layer.1} parent=0 // loop_pre_header
    _
  $region3: #{skip_layer.1} parent=0 // loop_header
    %s9 = sphi 0, %s13
    %p10 = scmp.ge.s32.totalorder %s9, 4
    %s19 = sphi 0, %s21
    %s22 = sphi 0, %s19
    %s23 = sphi 0, %s22
    %s39 = sphi 0, %s23
    %s43 = sphi 0, %s43
    %s45 = sphi 0, %s43
    %s46 = sphi 0, %s45
    %s60 = sphi 0, %s46
    %s64 = sphi 0, %s64
    %s66 = sphi 0, %s64
    %s67 = sphi 0, %s66
    %s81 = sphi 0, %s67
    %s87 = sphi 0, %s89
    %s90 = sphi 0, %s87
    %s91 = sphi 0, %s90
    %s107 = sphi 0, %s91
  $region4: #{skip_layer.1} parent=0 // loop_header_branch
    %12 = sbr.rel (%p10) target = $region8
  $region5: #{skip_layer.1} parent=0 // loop_body
    %s14 = ssub.s32 %s9, 1
    %s15 = ssub.s32 %s9, 2
    %s16 = sadd.s32 %s9, 1
    %s17 = ssub.s32 %s9, %s16
    %p18 = scmp.eq.s32.totalorder %s17, 0
    %s20 = sadd.s32 %s19, 1
    %s21 = scalar_select %p18, %s19, %s20
    %p24 = pneg %p18
    %p25 = scmp.eq.s32.totalorder %s9, 1
    %p26 = por %p24, %p25
    %p27 = scmp.ne.s32.totalorder %s19, %s22
    %p28 = scmp.eq.s32.totalorder %s9, 0
    %p29 = por %p27, %p28
    %p30 = scmp.ne.s32.totalorder %s19, %s22
    %p31 = scmp.eq.s32.totalorder %s14, 1
    %p32 = por %p30, %p31
    %p33 = scmp.ne.s32.totalorder %s22, %s23
    %p34 = scmp.eq.s32.totalorder %s14, 0
    %p35 = por %p33, %p34
    %p36 = scmp.ne.s32.totalorder %s22, %s23
    %p37 = scmp.eq.s32.totalorder %s15, 1
    %p38 = por %p36, %p37
    %p40 = scmp.ne.s32.totalorder %s23, %s39
    %p41 = scmp.eq.s32.totalorder %s15, 0
    %p42 = por %p40, %p41
    %s44 = sadd.s32 %s43, 1
    %p47 = scmp.eq.s32.totalorder %s9, 1
    %p48 = scmp.ne.s32.totalorder %s43, %s45
    %p49 = scmp.eq.s32.totalorder %s9, 0
    %p50 = por %p48, %p49
    %p51 = scmp.ne.s32.totalorder %s43, %s45
    %p52 = scmp.eq.s32.totalorder %s14, 1
    %p53 = por %p51, %p52
    %p54 = scmp.ne.s32.totalorder %s45, %s46
    %p55 = scmp.eq.s32.totalorder %s14, 0
    %p56 = por %p54, %p55
    %p57 = scmp.ne.s32.totalorder %s45, %s46
    %p58 = scmp.eq.s32.totalorder %s15, 1
    %p59 = por %p57, %p58
    %p61 = scmp.ne.s32.totalorder %s46, %s60
    %p62 = scmp.eq.s32.totalorder %s15, 0
    %p63 = por %p61, %p62
    %s65 = sadd.s32 %s64, 1
    %p68 = scmp.eq.s32.totalorder %s9, 1
    %p69 = scmp.ne.s32.totalorder %s64, %s66
    %p70 = scmp.eq.s32.totalorder %s9, 0
    %p71 = por %p69, %p70
    %p72 = scmp.ne.s32.totalorder %s64, %s66
    %p73 = scmp.eq.s32.totalorder %s14, 1
    %p74 = por %p72, %p73
    %p75 = scmp.ne.s32.totalorder %s66, %s67
    %p76 = scmp.eq.s32.totalorder %s14, 0
    %p77 = por %p75, %p76
    %p78 = scmp.ne.s32.totalorder %s66, %s67
    %p79 = scmp.eq.s32.totalorder %s15, 1
    %p80 = por %p78, %p79
    %p82 = scmp.ne.s32.totalorder %s67, %s81
    %p83 = scmp.eq.s32.totalorder %s15, 0
    %p84 = por %p82, %p83
    %s85 = ssub.s32 %s9, %s16
    %p86 = scmp.eq.s32.totalorder %s85, 0
    %s88 = sadd.s32 %s87, 1
    %s89 = scalar_select %p86, %s87, %s88
    %p92 = pneg %p86
    %p93 = scmp.eq.s32.totalorder %s9, 1
    %p94 = por %p92, %p93
    %p95 = scmp.ne.s32.totalorder %s87, %s90
    %p96 = scmp.eq.s32.totalorder %s9, 0
    %p97 = por %p95, %p96
    %p98 = scmp.ne.s32.totalorder %s87, %s90
    %p99 = scmp.eq.s32.totalorder %s14, 1
    %p100 = por %p98, %p99
    %p101 = scmp.ne.s32.totalorder %s90, %s91
    %p102 = scmp.eq.s32.totalorder %s14, 0
    %p103 = por %p101, %p102
    %p104 = scmp.ne.s32.totalorder %s90, %s91
    %p105 = scmp.eq.s32.totalorder %s15, 1
    %p106 = por %p104, %p105
    %p108 = scmp.ne.s32.totalorder %s91, %s107
    %p109 = scmp.eq.s32.totalorder %s15, 0
    %p110 = por %p108, %p109
    %p111 = scmp.le.s32.totalorder 1, %s9
    %p112 = scmp.lt.s32.totalorder %s9, 3
    %p113 = pnand %p111, %p112
    %p114 = pneg %p113
    // Predicated region
    $region9: #{skip_layer.1} parent=5 // pred_check
      _
    $region10: #{skip_layer.1} parent=5 // pred_check_branch
      %116 = sbr.rel (%p113) target = $region12
    $region11: #{skip_layer.1} parent=5 // pred_region
      %s117 = ssub.s32 %s9, 1
      // Predicated region
      $region13: #{skip_layer.1} parent=11 // pred_check
        %p118 = pneg %p56
      $region14: #{skip_layer.1} parent=11 // pred_check_branch
        %120 = sbr.rel (%p118) target = $region16
      $region15: #{skip_layer.1} parent=11 // pred_region
        _
      $region16: #{skip_layer.1} parent=11 // pred_fallthru
        _
      // Predicated region
      $region17: #{skip_layer.1} parent=11 // pred_check
        %p121 = pneg %p77
      $region18: #{skip_layer.1} parent=11 // pred_check_branch
        %123 = sbr.rel (%p121) target = $region20
      $region19: #{skip_layer.1} parent=11 // pred_region
        _
      $region20: #{skip_layer.1} parent=11 // pred_fallthru
        _
    $region12: #{skip_layer.1} parent=5 // pred_fallthru
      _
    %p124 = scmp.lt.s32.totalorder %s9, 2
    // Predicated region
    $region21: #{skip_layer.1} parent=5 // pred_check
      %p125 = pneg %p124
    $region22: #{skip_layer.1} parent=5 // pred_check_branch
      %127 = sbr.rel (%p125) target = $region24
    $region23: #{skip_layer.1} parent=5 // pred_region
      // Predicated region
      $region25: #{skip_layer.1} parent=23 // pred_check
        %p128 = pneg %p29
      $region26: #{skip_layer.1} parent=23 // pred_check_branch
        %130 = sbr.rel (%p128) target = $region28
      $region27: #{skip_layer.1} parent=23 // pred_region
        %p131 = scmp.lt.s32.totalorder %s9, 1
        %s132 = scalar_select %p131, %s9, 1
        %s133 = smul.addr %s132, 8
        %s134 = scalar_lea.vmem %s0, %s133
      $region28: #{skip_layer.1} parent=23 // pred_fallthru
        _
    $region24: #{skip_layer.1} parent=5 // pred_fallthru
      _
    %p135 = scmp.le.s32.totalorder 1, %s9
    %p136 = scmp.lt.s32.totalorder %s9, 3
    %p137 = pnand %p135, %p136
    %p138 = pneg %p137
    // Predicated region
    $region29: #{skip_layer.1} parent=5 // pred_check
      _
    $region30: #{skip_layer.1} parent=5 // pred_check_branch
      %140 = sbr.rel (%p137) target = $region32
    $region31: #{skip_layer.1} parent=5 // pred_region
      %s141 = ssub.s32 %s9, 1
      %p142 = scmp.lt.s32.totalorder %s14, 1
      %s143 = scalar_select %p142, %s14, 1
      %s144 = smul.addr %s143, 8
      %s145 = scalar_lea.vmem %s0, %s144
      %p146 = pneg %p35
      %p147 = pneg %p32
      %p148 = pneg %p56
      %p149 = pneg %p53
      %p150 = pneg %p77
      %p151 = pneg %p74
      %p152 = pneg %p103
      %p153 = pneg %p100
      %p154 = scmp.lt.s32.totalorder %s14, 1
      %s155 = scalar_select %p154, %s14, 1
      %s156 = smul.addr %s155, 8
      %s157 = scalar_lea.vmem %s3, %s156
      %p158 = scmp.lt.s32.totalorder %s14, 1
      %s159 = scalar_select %p158, %s14, 1
      %s160 = smul.addr %s159, 8
      %s161 = scalar_lea.vmem %s0, %s160
      %p162 = scmp.lt.s32.totalorder %s14, 1
      %s163 = scalar_select %p162, %s14, 1
      %s164 = smul.addr %s163, 8
      %s165 = scalar_lea.vmem %s3, %s164
      %v166 = vld [vmem:[%s161] sm:$0xff]
      %v167 = vld [vmem:[%s1] sm:$0xff]
      %v168 = vld [vmem:[%s1 + $0x8] sm:$0xff]
      %v169 = vld [vmem:[%s1 + $0x10] sm:$0xff]
      %v170 = vld [vmem:[%s1 + $0x18] sm:$0xff]
      %v171 = vld [vmem:[%s1 + $0x20] sm:$0xff]
      %v172 = vld [vmem:[%s1 + $0x28] sm:$0xff]
      %v173 = vld [vmem:[%s1 + $0x30] sm:$0xff]
      %v174 = vld [vmem:[%s1 + $0x38] sm:$0xff]
      %v175 = vld [vmem:[%s1 + $0x40] sm:$0xff]
      %v176 = vld [vmem:[%s1 + $0x48] sm:$0xff]
      %v177 = vld [vmem:[%s1 + $0x50] sm:$0xff]
      %v178 = vld [vmem:[%s1 + $0x58] sm:$0xff]
      %v179 = vld [vmem:[%s1 + $0x60] sm:$0xff]
      %v180 = vld [vmem:[%s1 + $0x68] sm:$0xff]
      %v181 = vld [vmem:[%s1 + $0x70] sm:$0xff]
      %v182 = vld [vmem:[%s1 + $0x78] sm:$0xff]
      %v183 = vld [vmem:[%s2] sm:$0x1]
      %v185 = vlaneseq
      %v186 = vshrl.u32 %v185, 7
      %v187 = vsub.s32 0, %v186
      %v188 = vrot.slane %v183, %v187
      %190 = vmatprep.subr.mxu0 0.0
      %191 = vmatpush1.msra.mxu0 %v167
      %192 = vmatprep.subr.mxu0 0.0
      %193 = vmatpush1.msra.mxu0 %v168
      %194 = vmatprep.subr.mxu0 0.0
      %195 = vmatpush1.msra.mxu0 %v169
      %196 = vmatprep.subr.mxu0 0.0
      %197 = vmatpush1.msra.mxu0 %v170
      %198 = vmatprep.subr.mxu0 0.0
      %199 = vmatpush1.msra.mxu0 %v171
      %200 = vmatprep.subr.mxu0 0.0
      %201 = vmatpush1.msra.mxu0 %v172
      %202 = vmatprep.subr.mxu0 0.0
      %203 = vmatpush1.msra.mxu0 %v173
      %204 = vmatprep.subr.mxu0 0.0
      %205 = vmatpush1.msra.mxu0 %v174
      %206 = vmatprep.subr.mxu0 0.0
      %207 = vmatpush1.msra.mxu0 %v175
      %208 = vmatprep.subr.mxu0 0.0
      %209 = vmatpush1.msra.mxu0 %v176
      %210 = vmatprep.subr.mxu0 0.0
      %211 = vmatpush1.msra.mxu0 %v177
      %212 = vmatprep.subr.mxu0 0.0
      %213 = vmatpush1.msra.mxu0 %v178
      %214 = vmatprep.subr.mxu0 0.0
      %215 = vmatpush1.msra.mxu0 %v179
      %216 = vmatprep.subr.mxu0 0.0
      %217 = vmatpush1.msra.mxu0 %v180
      %218 = vmatprep.subr.mxu0 0.0
      %219 = vmatpush1.msra.mxu0 %v181
      %220 = vmatprep.subr.mxu0 0.0
      %221 = vmatpush1.msra.mxu0 %v182
      %222 = vmatprep.subr.mxu0 0.0
      %223 = vmatpush1.msra.mxu0 0.0
      %224 = vmatprep.subr.mxu0 0.0
      %225 = vmatpush1.msra.mxu0 0.0
      %226 = vmatprep.subr.mxu0 0.0
      %227 = vmatpush1.msra.mxu0 0.0
      %228 = vmatprep.subr.mxu0 0.0
      %229 = vmatpush1.msra.mxu0 0.0
      %230 = vmatprep.subr.mxu0 0.0
      %231 = vmatpush1.msra.mxu0 0.0
      %232 = vmatprep.subr.mxu0 0.0
      %233 = vmatpush1.msra.mxu0 0.0
      %234 = vmatprep.subr.mxu0 0.0
      %235 = vmatpush1.msra.mxu0 0.0
      %236 = vmatprep.subr.mxu0 0.0
      %237 = vmatpush1.msra.mxu0 0.0
      %238 = vmatprep.subr.mxu0 0.0
      %239 = vmatpush1.msra.mxu0 0.0
      %240 = vmatprep.subr.mxu0 0.0
      %241 = vmatpush1.msra.mxu0 0.0
      %242 = vmatprep.subr.mxu0 0.0
      %243 = vmatpush1.msra.mxu0 0.0
      %244 = vmatprep.subr.mxu0 0.0
      %245 = vmatpush1.msra.mxu0 0.0
      %246 = vmatprep.subr.mxu0 0.0
      %247 = vmatpush1.msra.mxu0 0.0
      %248 = vmatprep.subr.mxu0 0.0
      %249 = vmatpush1.msra.mxu0 0.0
      %250 = vmatprep.subr.mxu0 0.0
      %251 = vmatpush1.msra.mxu0 0.0
      %252 = vmatprep.subr.mxu0 0.0
      %253 = vmatpush1.msra.mxu0 0.0
      %254 = vmatprep.mubr.f32.mxu0 0.0
      %255 = vmatmul.mubr.f32.gmra.mrb[0].mxu0 %v166
      %v256 = vpop.f32.mrb[0].mxu0
      %v257 = vadd.f32 %v188, %v256
      %v258 = vpop.f32.mrb[0].mxu0
      %259 = vdwg.mxu0
      %v260 = vadd.f32 %v257, %v166
      %261 = vst [vmem:[%s165] sm:$0xff] %v260
      %p262 = scmp.lt.s32.totalorder %s14, 1
      %s263 = scalar_select %p262, %s14, 1
      %s264 = smul.addr %s263, 8
      %s265 = scalar_lea.vmem %s3, %s264
      // Predicated region
      $region33: #{skip_layer.1} parent=31 // pred_check
        %p266 = pneg %p100
      $region34: #{skip_layer.1} parent=31 // pred_check_branch
        %268 = sbr.rel (%p266) target = $region36
      $region35: #{skip_layer.1} parent=31 // pred_region
        _
      $region36: #{skip_layer.1} parent=31 // pred_fallthru
        _
    $region32: #{skip_layer.1} parent=5 // pred_fallthru
      _
    %p269 = scmp.le.s32.totalorder 2, %s9
    // Predicated region
    $region37: #{skip_layer.1} parent=5 // pred_check
      %p270 = pneg %p269
    $region38: #{skip_layer.1} parent=5 // pred_check_branch
      %272 = sbr.rel (%p270) target = $region40
    $region39: #{skip_layer.1} parent=5 // pred_region
      %s273 = ssub.s32 %s9, 2
      // Predicated region
      $region41: #{skip_layer.1} parent=39 // pred_check
        %p274 = pneg %p106
      $region42: #{skip_layer.1} parent=39 // pred_check_branch
        %276 = sbr.rel (%p274) target = $region44
      $region43: #{skip_layer.1} parent=39 // pred_region
        %p277 = scmp.lt.s32.totalorder %s15, 1
        %s278 = scalar_select %p277, %s15, 1
        %s279 = smul.addr %s278, 8
        %s280 = scalar_lea.vmem %s3, %s279
      $region44: #{skip_layer.1} parent=39 // pred_fallthru
        _
    $region40: #{skip_layer.1} parent=5 // pred_fallthru
      _
  $region6: #{skip_layer.1} parent=0 // loop_footer
    %s13 = sadd.s32 1, %s9
  $region7: #{skip_layer.1} parent=0 // loop_footer_branch
    %8 = sbr.rel target = $region3
  $region8: #{skip_layer.1} parent=0 // loop_exit
    _

</llo_original>
